<compile_context>
chip_gen: v7x
topology: tpu7x:2x2x1
jax: 0.10.0
libtpu: 0.0.40
codegen_flags: <defaults>
</compile_context>

<pallas_src>
import math

import jax
import jax.numpy as jnp
from jax.experimental import pallas as pl
from jax.experimental.pallas import tpu as pltpu

_LANES = 128
_MAX_BLOCK_ROWS = 1024  # ~512 KiB f32 per output block at 128 lanes (VMEM-safe on v5e/v6e/v7x)


def _broadcast_scale_kernel(row_ref, out_ref):
    # Fill the output tile with the precomputed (1, width) scale pattern row.
    # No x read, no transcendental work in-kernel: a single unmasked store stream.
    out_ref[...] = jnp.broadcast_to(row_ref[...], out_ref.shape)


def _broadcast_rows(row: jax.Array, n_rows: int, width: int) -> jax.Array:
    """Pallas broadcast of a (1, width) f32 row into an (n_rows, width) f32 array."""
    if n_rows <= _MAX_BLOCK_ROWS:
        block_rows = n_rows            # single block == full array dims (always layout-legal)
    else:
        block_rows = _MAX_BLOCK_ROWS   # multiple of 8; ragged tail masked by Pallas
    grid = (pl.cdiv(n_rows, block_rows),)
    return pl.pallas_call(
        _broadcast_scale_kernel,
        out_shape=jax.ShapeDtypeStruct((n_rows, width), jnp.float32),
        grid_spec=pltpu.PrefetchScalarGridSpec(
            num_scalar_prefetch=0,
            grid=grid,
            in_specs=[pl.BlockSpec((1, width), lambda i: (0, 0))],
            out_specs=pl.BlockSpec((block_rows, width), lambda i: (i, 0)),
        ),
        compiler_params=pltpu.CompilerParams(
            dimension_semantics=("parallel",)),
    )(row)


def gaussian_head_forward(x: jax.Array,
                          std_param: jax.Array,
                          *,
                          use_log_std: bool = False,
                          min_action_std: float = 0.1,
                          max_action_std: float = 0.8):
    """Returns (loc, scale): loc is x itself (no copy); scale is f32, broadcast to x.shape."""
    orig_shape = x.shape
    action_dim = orig_shape[-1]
    assert std_param.shape == (action_dim,)

    # --- std transform: O(action_dim) work, hoisted out of the kernel into plain JAX.
    p = std_param.astype(jnp.float32)
    if use_log_std:
        scale_row = jnp.exp(p)
    else:
        scale_row = min_action_std + (max_action_std - min_action_std) * jax.nn.sigmoid(p)

    # --- loc: identity pass-through, never touches the kernel.
    loc = x

    # --- scale: materialize the broadcast to x.shape with a mem-bound Pallas kernel.
    # TODO(synk): if downstream log_prob can consume an (action_dim,) scale directly,
    # this broadcast (the only real HBM cost of the op) can be skipped entirely.
    n_rows = math.prod(orig_shape[:-1])
    total = n_rows * action_dim

    if total > 0 and total % _LANES == 0 and _LANES % action_dim == 0:
        # Lane-dense path: view the flat output as (R, 128); every 128-lane row is the
        # scale pattern tiled 128 // action_dim times -> full-width unmasked stores.
        reps = _LANES // action_dim
        flat_rows = total // _LANES
        row = jnp.tile(scale_row, reps).reshape(1, _LANES)
        scale = _broadcast_rows(row, flat_rows, _LANES).reshape(orig_shape)
    else:
        # Generic path: keep action_dim as the lane axis (full-dim last block is legal).
        row = scale_row.reshape(1, action_dim)
        scale = _broadcast_rows(row, max(n_rows, 1), action_dim).reshape(orig_shape)

    return loc, scale


if __name__ == "__main__":
    # Small shapes consistent with the module: batch=2, seq=8, action_dim=32.
    B, T, A = 2, 8, 32
    min_action_std, max_action_std = 0.1, 0.8

    key = jax.random.PRNGKey(0)
    x = jax.random.normal(key, (B, T, A), dtype=jnp.float32)

    # ---- use_log_std=False (module default): std init = 0.0
    std_param = jnp.ones((A,), dtype=jnp.float32) * 0.0
    loc, scale = gaussian_head_forward(
        x, std_param,
        use_log_std=False,
        min_action_std=min_action_std,
        max_action_std=max_action_std,
    )
    jax.block_until_ready((loc, scale))

    ref_scale = min_action_std + (max_action_std - min_action_std) * jax.nn.sigmoid(std_param)
    assert loc.shape == x.shape and jnp.allclose(loc, x), "loc mismatch"
    assert jnp.allclose(scale, jnp.broadcast_to(ref_scale, x.shape), atol=1e-6), "scale mismatch"

    # ---- use_log_std=True: std init = min_action_std, scale = exp(std)
    std_param2 = jnp.ones((A,), dtype=jnp.float32) * min_action_std
    loc2, scale2 = gaussian_head_forward(
        x, std_param2,
        use_log_std=True,
        min_action_std=min_action_std,
        max_action_std=max_action_std,
    )
    jax.block_until_ready((loc2, scale2))
    assert jnp.allclose(loc2, x), "loc mismatch (log_std path)"
    assert jnp.allclose(scale2, jnp.broadcast_to(jnp.exp(std_param2), x.shape),
                        atol=1e-6), "scale mismatch (log_std path)"

    # TODO(synk): log_prob / imitation_loss are downstream Distribution methods,
    # not part of GaussianHead.forward; not kernelized here.

    print("KERNEL_OK")
</pallas_src>

<mosaic_0001>
module attributes {stable_mosaic.version = 11 : i64} {
  func.func @_broadcast_scale_kernel(%arg0: i32, %arg1: memref<1x128xf32, #tpu.memory_space<vmem>>, %arg2: memref<4x128xf32, #tpu.memory_space<vmem>>) attributes {dimension_semantics = [#tpu.dimension_semantics<parallel>], iteration_bounds = array<i64: 1>, scalar_prefetch = 0 : i64, scratch_operands = 0 : i64, tpu.core_type = #tpu.core_type<tc>, window_params = [{pipeline_mode = #tpu.pipeline_mode<synchronous>, transform_indices = @transform_0, window_bounds = array<i64: 1, 128>}, {transform_indices = @transform_1, window_bounds = array<i64: 4, 128>}]} {
    %c0 = arith.constant 0 : index
    %c0_0 = arith.constant 0 : index
    %0 = vector.load %arg1[%c0, %c0_0] : memref<1x128xf32, #tpu.memory_space<vmem>>, vector<1x128xf32>
    %1 = vector.shape_cast %0 : vector<1x128xf32> to vector<1x128xf32>
    %2 = vector.broadcast %1 : vector<1x128xf32> to vector<4x128xf32>
    %c0_1 = arith.constant 0 : index
    %c0_2 = arith.constant 0 : index
    %3 = vector.load %arg2[%c0_1, %c0_2] : memref<4x128xf32, #tpu.memory_space<vmem>>, vector<4x128xf32>
    tpu.vector_store %arg2[%c0_1, %c0_2], %2 {strides = array<i32>} : memref<4x128xf32, #tpu.memory_space<vmem>>, vector<4x128xf32>,
    return
  }
  func.func @transform_0(%arg0: i32) -> (i32, i32) {
    %c0_i32 = arith.constant 0 : i32
    %c0_i32_0 = arith.constant 0 : i32
    %c0_i32_1 = arith.constant 0 : i32
    return %c0_i32, %c0_i32_0 : i32, i32
  }
  func.func @transform_1(%arg0: i32) -> (i32, i32) {
    %c0_i32 = arith.constant 0 : i32
    %c0_i32_0 = arith.constant 0 : i32
    return %arg0, %c0_i32 : i32, i32
  }
}

</mosaic_0001>

<llo_original>
// kernel: tpu_custom_call.1
$region0: #{tpu_custom_call.1}
  #allocation0 [shape = 'u32[]', space=smem, size = 0x4, offset = 0x4, fixed_abs, tag = 'smem constant byte address 0x4 - core index']
  #allocation1 [shape = 'u32[144,128]{1,0:T(1,128)}', space=vmem, size = 0x12000, scoped, tag = 'internal scratch']
  %s0 = inlined_call_operand.hbm [shape: f32[1,128], index: 0, kind: input, shape index: {}]
  %s1 = inlined_call_operand.hbm [shape: f32[4,128], index: 1, kind: output, shape index: {}]
  %s2 = sld [smem:[#allocation0]]
  $region18: #{tpu_custom_call.1} parent=0
    _
  %s4 = ssub.s32 1, %s2
  %s5 = scalar_select 0, %s4, %s2
  $region1: #{tpu_custom_call.1} parent=0
    #allocation2 [shape = 'u8[512]{0}', space=vmem, size = 0x400, scoped, tag = 'input window, operand 0, single buffered']
    #allocation3 [shape = 's32[1]{0}', space=sflag, size = 0x4, scoped, tag = 'scoped memory for tpu_custom_call.1']
    #allocation4 [shape = 's32[1]{0}', space=sflag, size = 0x4, scoped, tag = 'scoped memory for tpu_custom_call.1']
    #allocation5 [shape = 'u8[2048]{0}', space=vmem, size = 0x800, scoped, tag = 'output window, operand 0, single buffered']
    %6 = vsyncpa [#allocation3], 0
    %7 = vsyncpa [#allocation4], 0
    // Predicated region
    $region2: #{tpu_custom_call.1} parent=1 // pred_check
      _
    $region3: #{tpu_custom_call.1} parent=1 // pred_check_branch
      %9 = sbr.rel (0) target = $region5
    $region4: #{tpu_custom_call.1} parent=1 // pred_region
      %s11 = ssub.s32 16, 16
      %12 = vsyncadd [#allocation3], %s11
      %s14 = sshll.u32 [#allocation2], 4
      %s15 = int_to_ptr.vmem [resolvable:$true] %s14
      %17 = dma.hbm_to_vmem [thread:$0]  %s0, 16, %s15, [#allocation3]
    $region5: #{tpu_custom_call.1} parent=1 // pred_fallthru
      _
    // Predicated region
    $region6: #{tpu_custom_call.1} parent=1 // pred_check
      _
    $region7: #{tpu_custom_call.1} parent=1 // pred_check_branch
      %19 = sbr.rel (0) target = $region9
    $region8: #{tpu_custom_call.1} parent=1 // pred_region
      %20 = dma.done [#allocation3], 16
    $region9: #{tpu_custom_call.1} parent=1 // pred_fallthru
      _
    %v21 = vld [vmem:[#allocation2] sm:$0x1]
    %v23 = vlaneseq
    %v24 = vshrl.u32 %v23, 7
    %v25 = vsub.s32 0, %v24
    %v26 = vrot.slane %v21, %v25
    %28 = vst [vmem:[#allocation5] sm:$0xf] %v26
    // Predicated region
    $region10: #{tpu_custom_call.1} parent=1 // pred_check
      _
    $region11: #{tpu_custom_call.1} parent=1 // pred_check_branch
      %30 = sbr.rel (0) target = $region13
    $region12: #{tpu_custom_call.1} parent=1 // pred_region
      %s32 = ssub.s32 64, 64
      %33 = vsyncadd [#allocation4], %s32
      %s35 = sshll.u32 [#allocation5], 4
      %s36 = int_to_ptr.vmem [resolvable:$true] %s35
      %38 = dma.vmem_to_hbm [thread:$0]  %s36, 64, %s1, [#allocation4]
    $region13: #{tpu_custom_call.1} parent=1 // pred_fallthru
      _
    // Predicated region
    $region14: #{tpu_custom_call.1} parent=1 // pred_check
      _
    $region15: #{tpu_custom_call.1} parent=1 // pred_check_branch
      %40 = sbr.rel (0) target = $region17
    $region16: #{tpu_custom_call.1} parent=1 // pred_region
      %41 = dma.done [#allocation4], 64
    $region17: #{tpu_custom_call.1} parent=1 // pred_fallthru
      _
    %42 = vsyncpa [#allocation3], 1
    %43 = vsyncpa [#allocation4], 1

</llo_original>
